<compile_context>
chip_gen: v6e
topology: v6e:2x2x1
jax: 0.10.0
libtpu: 0.0.40
codegen_flags: <defaults>
</compile_context>

<pallas_src>
import jax
import jax.numpy as jnp
from jax import lax
from jax.experimental import pallas as pl
from jax.experimental.pallas import tpu as pltpu


def lstm_kernel(x_ref, wx_ref, wh_ref, b_ref, out_ref, gates_ref):
    """Fused kernel: global normalize -> LSTM recurrence -> denormalize.

    x_ref    : (T, B)    time-major input sequence
    wx_ref   : (B, 4B)   fused input->gate weights, column blocks [i|f|o|g]
    wh_ref   : (B, 4B)   fused hidden->gate weights, same column order
    b_ref    : (1, 4B)   combined bias (b_ih + b_hh), same column order
    out_ref  : (T, B)    denormalized hidden states
    gates_ref: (T, 4B)   VMEM scratch: precomputed x_t @ Wx + b (lane-dense)
    """
    x = x_ref[...]                                   # (T, B)

    # ---- normalize_by_axis(dim=None): global min/max reduction ----
    mn = jnp.min(x)
    mx = jnp.max(x)
    p2p = mx - mn
    xn = (x - mn) / p2p
    xn = jnp.where(jnp.isnan(xn), jnp.zeros_like(xn), xn)

    # ---- precompute x_t @ Wx + b for every timestep, all gates fused ----
    # Single (T,B)@(B,4B) MXU matmul; result is exactly 128 lanes wide.
    gates_ref[...] = (
        jnp.dot(xn, wx_ref[...], preferred_element_type=jnp.float32)
        + b_ref[...])

    wh = wh_ref[...]                                 # (B, 4B), hoisted load

    T, B = out_ref.shape
    h0 = jnp.zeros((1, B), jnp.float32)
    c0 = jnp.zeros((1, B), jnp.float32)

    def step(t, carry):
        h, c = carry
        # One lane-dense (1,128) load + ONE MXU matmul per step.
        z = gates_ref[pl.ds(t, 1), :] + jnp.dot(
            h, wh, preferred_element_type=jnp.float32)          # (1, 4B)
        # 2 EUP pushes per step: one sigmoid vreg pass (covers i|f|o lanes),
        # one tanh pass for the g lanes.
        sig = jax.nn.sigmoid(z)
        i = sig[:, :B]
        f = sig[:, B:2 * B]
        o = sig[:, 2 * B:3 * B]
        g = jnp.tanh(z[:, 3 * B:])
        c_new = f * c + i * g
        h_new = o * jnp.tanh(c_new)
        # Store RAW h; denormalization is done in one vectorized pass after
        # the loop (off the serial critical path).
        out_ref[pl.ds(t, 1), :] = h_new
        return (h_new, c_new)

    # Fully unroll the short, static recurrence so the scheduler can overlap
    # stores / non-dependent EUP work with the next step's MXU push.
    lax.fori_loop(0, T, step, (h0, c0), unroll=True)

    # ---- denormalize: single vectorized sweep over the whole (T, B) tile ----
    out_ref[...] = out_ref[...] * p2p + mn


def ecgi_temporal_forward(x, w_ih, w_hh, b_ih, b_hh):
    """x: (B, 1, T) float32; returns (B, 1, T) float32."""
    B, _, T = x.shape
    H = B
    assert w_ih.shape == (4 * H, H) and w_hh.shape == (4 * H, H)

    seq = jnp.transpose(x[:, 0, :])                  # (T, B) time-major

    def fuse_gates(w):
        # PyTorch layout: rows are [i; f; g; o] blocks of (H, H) acting as
        # gate = w_blk @ x.  Build x_row @ Wx_cat with columns [i|f|o|g] so the
        # sigmoid gates occupy a contiguous lane range.
        w4 = w.reshape(4, H, H)
        return jnp.concatenate(
            [w4[0].T, w4[1].T, w4[3].T, w4[2].T], axis=1)       # (H, 4H)

    wx = fuse_gates(w_ih)                            # (H, 4H)
    wh = fuse_gates(w_hh)                            # (H, 4H)
    b4 = (b_ih + b_hh).reshape(4, H)
    b = jnp.concatenate([b4[0], b4[1], b4[3], b4[2]]).reshape(1, 4 * H)

    out = pl.pallas_call(
        lstm_kernel,
        out_shape=jax.ShapeDtypeStruct((T, H), jnp.float32),
        in_specs=[pl.BlockSpec(memory_space=pltpu.MemorySpace.VMEM)] * 4,
        out_specs=pl.BlockSpec(memory_space=pltpu.MemorySpace.VMEM),
        scratch_shapes=[pltpu.VMEM((T, 4 * H), jnp.float32)],
    )(seq, wx, wh, b)

    return jnp.transpose(out)[:, None, :]            # (B, 1, T)


def ecgi_temporal_reference(x, w_ih, w_hh, b_ih, b_hh):
    """Pure-JAX reference mirroring the PyTorch forward (for verification)."""
    mn = jnp.min(x)
    mx = jnp.max(x)
    p2p = mx - mn
    xn = (x - mn) / p2p
    xn = jnp.where(jnp.isnan(xn), jnp.zeros_like(xn), xn)
    seq = jnp.transpose(xn[:, 0, :])                 # (T, B)
    H = w_hh.shape[1]

    def step(carry, xt):
        h, c = carry
        gates = w_ih @ xt + b_ih + w_hh @ h + b_hh   # (4H,) PyTorch order i,f,g,o
        i = jax.nn.sigmoid(gates[0:H])
        f = jax.nn.sigmoid(gates[H:2 * H])
        g = jnp.tanh(gates[2 * H:3 * H])
        o = jax.nn.sigmoid(gates[3 * H:4 * H])
        c = f * c + i * g
        h = o * jnp.tanh(c)
        return (h, c), h

    (_, _), hs = lax.scan(step, (jnp.zeros(H), jnp.zeros(H)), seq)
    out = hs * p2p + mn                              # (T, B)
    return jnp.transpose(out)[:, None, :]            # (B, 1, T)


if __name__ == "__main__":
    B = 32   # batch_size passed to ECGI_Denoiser == LSTM input_size == hidden_size
    T = 8    # sequence length (time steps seen by the temporal block)

    key = jax.random.PRNGKey(0)
    kx, k1, k2, k3, k4 = jax.random.split(key, 5)

    x = jax.random.normal(kx, (B, 1, T), dtype=jnp.float32) * 3.0 + 1.0

    # Same shapes as torch.nn.LSTM(B, B), uniform in [-1/sqrt(H), 1/sqrt(H)].
    bound = 1.0 / jnp.sqrt(jnp.float32(B))
    w_ih = jax.random.uniform(k1, (4 * B, B), jnp.float32, -bound, bound)
    w_hh = jax.random.uniform(k2, (4 * B, B), jnp.float32, -bound, bound)
    b_ih = jax.random.uniform(k3, (4 * B,), jnp.float32, -bound, bound)
    b_hh = jax.random.uniform(k4, (4 * B,), jnp.float32, -bound, bound)

    out = jax.jit(ecgi_temporal_forward)(x, w_ih, w_hh, b_ih, b_hh)
    out = jax.block_until_ready(out)

    ref = jax.block_until_ready(ecgi_temporal_reference(x, w_ih, w_hh, b_ih, b_hh))

    assert out.shape == (B, 1, T), out.shape
    assert jnp.allclose(out, ref, rtol=5e-3, atol=5e-3), (
        float(jnp.max(jnp.abs(out - ref))))

    print("KERNEL_OK")
</pallas_src>

<mosaic_0001>
module attributes {stable_mosaic.version = 11 : i64} {
  func.func @lstm_kernel(%arg0: memref<8x32xf32, #tpu.memory_space<vmem>>, %arg1: memref<32x128xf32, #tpu.memory_space<vmem>>, %arg2: memref<32x128xf32, #tpu.memory_space<vmem>>, %arg3: memref<1x128xf32, #tpu.memory_space<vmem>>, %arg4: memref<8x32xf32, #tpu.memory_space<vmem>>, %arg5: memref<8x128xf32, #tpu.memory_space<vmem>>) attributes {dimension_semantics = [], scalar_prefetch = 0 : i64, scratch_operands = 1 : i64, tpu.core_type = #tpu.core_type<tc>} {
    %c0 = arith.constant 0 : index
    %c0_0 = arith.constant 0 : index
    %0 = vector.load %arg0[%c0, %c0_0] : memref<8x32xf32, #tpu.memory_space<vmem>>, vector<8x32xf32>
    %1 = vector.shape_cast %0 : vector<8x32xf32> to vector<1x8x32xf32>
    %cst = arith.constant dense<0x7F800000> : vector<1xf32>
    %2 = vector.multi_reduction <minimumf>, %1, %cst [1, 2] : vector<1x8x32xf32> to vector<1xf32>
    %3 = vector.shape_cast %2 : vector<1xf32> to vector<1x1x1xf32>
    %4 = vector.extract %3[0, 0, 0] : f32 from vector<1x1x1xf32>
    %5 = vector.shape_cast %0 : vector<8x32xf32> to vector<1x8x32xf32>
    %cst_1 = arith.constant dense<0xFF800000> : vector<1xf32>
    %6 = vector.multi_reduction <maximumf>, %5, %cst_1 [1, 2] : vector<1x8x32xf32> to vector<1xf32>
    %7 = vector.shape_cast %6 : vector<1xf32> to vector<1x1x1xf32>
    %8 = vector.extract %7[0, 0, 0] : f32 from vector<1x1x1xf32>
    %9 = arith.subf %8, %4 : f32
    %10 = vector.broadcast %4 : f32 to vector<8x32xf32>
    %11 = arith.subf %0, %10 : vector<8x32xf32>
    %12 = vector.broadcast %9 : f32 to vector<8x32xf32>
    %13 = arith.divf %11, %12 : vector<8x32xf32>
    %14 = arith.cmpf one, %13, %13 : vector<8x32xf32>
    %cst_2 = arith.constant 0.000000e+00 : f32
    %15 = vector.broadcast %cst_2 : f32 to vector<8x32xf32>
    %16 = arith.select %14, %15, %13 : vector<8x32xi1>, vector<8x32xf32>
    %c0_3 = arith.constant 0 : index
    %c0_4 = arith.constant 0 : index
    %17 = vector.load %arg1[%c0_3, %c0_4] : memref<32x128xf32, #tpu.memory_space<vmem>>, vector<32x128xf32>
    %cst_5 = arith.constant dense<0.000000e+00> : vector<8x128xf32>
    %18 = tpu.matmul %16, %17, %cst_5 {dimension_numbers = #tpu.dot_dimension_numbers<[1], [0], [0], [1], [0, 0, 1, 1], [], []>} : vector<8x32xf32>, vector<32x128xf32>, vector<8x128xf32> -> vector<8x128xf32>
    %c0_6 = arith.constant 0 : index
    %c0_7 = arith.constant 0 : index
    %19 = vector.load %arg3[%c0_6, %c0_7] : memref<1x128xf32, #tpu.memory_space<vmem>>, vector<1x128xf32>
    %20 = vector.broadcast %19 : vector<1x128xf32> to vector<8x128xf32>
    %21 = arith.addf %18, %20 : vector<8x128xf32>
    %c0_8 = arith.constant 0 : index
    %c0_9 = arith.constant 0 : index
    %22 = vector.load %arg5[%c0_8, %c0_9] : memref<8x128xf32, #tpu.memory_space<vmem>>, vector<8x128xf32>
    tpu.vector_store %arg5[%c0_8, %c0_9], %21 {strides = array<i32>} : memref<8x128xf32, #tpu.memory_space<vmem>>, vector<8x128xf32>,
    %c0_10 = arith.constant 0 : index
    %c0_11 = arith.constant 0 : index
    %23 = vector.load %arg2[%c0_10, %c0_11] : memref<32x128xf32, #tpu.memory_space<vmem>>, vector<32x128xf32>
    %cst_12 = arith.constant 0.000000e+00 : f32
    %24 = vector.broadcast %cst_12 : f32 to vector<1x32xf32>
    %cst_13 = arith.constant 0.000000e+00 : f32
    %25 = vector.broadcast %cst_13 : f32 to vector<1x32xf32>
    %c0_i32 = arith.constant 0 : i32
    %26 = arith.index_cast %c0_i32 : i32 to index
    %c0_14 = arith.constant 0 : index
    %27 = vector.load %arg5[%26, %c0_14] : memref<8x128xf32, #tpu.memory_space<vmem>>, vector<1x128xf32>
    %cst_15 = arith.constant dense<0.000000e+00> : vector<1x128xf32>
    %28 = tpu.matmul %24, %23, %cst_15 {dimension_numbers = #tpu.dot_dimension_numbers<[1], [0], [0], [1], [0, 0, 1, 1], [], []>} : vector<1x32xf32>, vector<32x128xf32>, vector<1x128xf32> -> vector<1x128xf32>
    %29 = arith.addf %27, %28 : vector<1x128xf32>
    %30 = arith.negf %29 : vector<1x128xf32>
    %31 = math.exp %30 : vector<1x128xf32>
    %cst_16 = arith.constant 1.000000e+00 : f32
    %32 = vector.broadcast %cst_16 : f32 to vector<1x128xf32>
    %33 = arith.addf %32, %31 : vector<1x128xf32>
    %34 = arith.divf %32, %33 : vector<1x128xf32>
    %35 = vector.extract_strided_slice %34 {offsets = [0, 0], sizes = [1, 32], strides = [1, 1]} : vector<1x128xf32> to vector<1x32xf32>
    %36 = vector.extract_strided_slice %34 {offsets = [0, 32], sizes = [1, 32], strides = [1, 1]} : vector<1x128xf32> to vector<1x32xf32>
    %37 = vector.extract_strided_slice %34 {offsets = [0, 64], sizes = [1, 32], strides = [1, 1]} : vector<1x128xf32> to vector<1x32xf32>
    %38 = vector.extract_strided_slice %29 {offsets = [0, 96], sizes = [1, 32], strides = [1, 1]} : vector<1x128xf32> to vector<1x32xf32>
    %39 = math.tanh %38 : vector<1x32xf32>
    %40 = arith.mulf %36, %25 : vector<1x32xf32>
    %41 = arith.mulf %35, %39 : vector<1x32xf32>
    %42 = arith.addf %40, %41 : vector<1x32xf32>
    %43 = math.tanh %42 : vector<1x32xf32>
    %44 = arith.mulf %37, %43 : vector<1x32xf32>
    %45 = arith.index_cast %c0_i32 : i32 to index
    %c0_17 = arith.constant 0 : index
    %46 = vector.load %arg4[%45, %c0_17] : memref<8x32xf32, #tpu.memory_space<vmem>>, vector<1x32xf32>
    tpu.vector_store %arg4[%45, %c0_17], %44 {strides = array<i32>} : memref<8x32xf32, #tpu.memory_space<vmem>>, vector<1x32xf32>,
    %c1_i32 = arith.constant 1 : i32
    %47 = arith.index_cast %c1_i32 : i32 to index
    %c0_18 = arith.constant 0 : index
    %48 = vector.load %arg5[%47, %c0_18] : memref<8x128xf32, #tpu.memory_space<vmem>>, vector<1x128xf32>
    %cst_19 = arith.constant dense<0.000000e+00> : vector<1x128xf32>
    %49 = tpu.matmul %44, %23, %cst_19 {dimension_numbers = #tpu.dot_dimension_numbers<[1], [0], [0], [1], [0, 0, 1, 1], [], []>} : vector<1x32xf32>, vector<32x128xf32>, vector<1x128xf32> -> vector<1x128xf32>
    %50 = arith.addf %48, %49 : vector<1x128xf32>
    %51 = arith.negf %50 : vector<1x128xf32>
    %52 = math.exp %51 : vector<1x128xf32>
    %cst_20 = arith.constant 1.000000e+00 : f32
    %53 = vector.broadcast %cst_20 : f32 to vector<1x128xf32>
    %54 = arith.addf %53, %52 : vector<1x128xf32>
    %55 = arith.divf %53, %54 : vector<1x128xf32>
    %56 = vector.extract_strided_slice %55 {offsets = [0, 0], sizes = [1, 32], strides = [1, 1]} : vector<1x128xf32> to vector<1x32xf32>
    %57 = vector.extract_strided_slice %55 {offsets = [0, 32], sizes = [1, 32], strides = [1, 1]} : vector<1x128xf32> to vector<1x32xf32>
    %58 = vector.extract_strided_slice %55 {offsets = [0, 64], sizes = [1, 32], strides = [1, 1]} : vector<1x128xf32> to vector<1x32xf32>
    %59 = vector.extract_strided_slice %50 {offsets = [0, 96], sizes = [1, 32], strides = [1, 1]} : vector<1x128xf32> to vector<1x32xf32>
    %60 = math.tanh %59 : vector<1x32xf32>
    %61 = arith.mulf %57, %42 : vector<1x32xf32>
    %62 = arith.mulf %56, %60 : vector<1x32xf32>
    %63 = arith.addf %61, %62 : vector<1x32xf32>
    %64 = math.tanh %63 : vector<1x32xf32>
    %65 = arith.mulf %58, %64 : vector<1x32xf32>
    %66 = arith.index_cast %c1_i32 : i32 to index
    %c0_21 = arith.constant 0 : index
    %67 = vector.load %arg4[%66, %c0_21] : memref<8x32xf32, #tpu.memory_space<vmem>>, vector<1x32xf32>
    tpu.vector_store %arg4[%66, %c0_21], %65 {strides = array<i32>} : memref<8x32xf32, #tpu.memory_space<vmem>>, vector<1x32xf32>,
    %c2_i32 = arith.constant 2 : i32
    %68 = arith.index_cast %c2_i32 : i32 to index
    %c0_22 = arith.constant 0 : index
    %69 = vector.load %arg5[%68, %c0_22] : memref<8x128xf32, #tpu.memory_space<vmem>>, vector<1x128xf32>
    %cst_23 = arith.constant dense<0.000000e+00> : vector<1x128xf32>
    %70 = tpu.matmul %65, %23, %cst_23 {dimension_numbers = #tpu.dot_dimension_numbers<[1], [0], [0], [1], [0, 0, 1, 1], [], []>} : vector<1x32xf32>, vector<32x128xf32>, vector<1x128xf32> -> vector<1x128xf32>
    %71 = arith.addf %69, %70 : vector<1x128xf32>
    %72 = arith.negf %71 : vector<1x128xf32>
    %73 = math.exp %72 : vector<1x128xf32>
    %cst_24 = arith.constant 1.000000e+00 : f32
    %74 = vector.broadcast %cst_24 : f32 to vector<1x128xf32>
    %75 = arith.addf %74, %73 : vector<1x128xf32>
    %76 = arith.divf %74, %75 : vector<1x128xf32>
    %77 = vector.extract_strided_slice %76 {offsets = [0, 0], sizes = [1, 32], strides = [1, 1]} : vector<1x128xf32> to vector<1x32xf32>
    %78 = vector.extract_strided_slice %76 {offsets = [0, 32], sizes = [1, 32], strides = [1, 1]} : vector<1x128xf32> to vector<1x32xf32>
    %79 = vector.extract_strided_slice %76 {offsets = [0, 64], sizes = [1, 32], strides = [1, 1]} : vector<1x128xf32> to vector<1x32xf32>
    %80 = vector.extract_strided_slice %71 {offsets = [0, 96], sizes = [1, 32], strides = [1, 1]} : vector<1x128xf32> to vector<1x32xf32>
    %81 = math.tanh %80 : vector<1x32xf32>
    %82 = arith.mulf %78, %63 : vector<1x32xf32>
    %83 = arith.mulf %77, %81 : vector<1x32xf32>
    %84 = arith.addf %82, %83 : vector<1x32xf32>
    %85 = math.tanh %84 : vector<1x32xf32>
    %86 = arith.mulf %79, %85 : vector<1x32xf32>
    %87 = arith.index_cast %c2_i32 : i32 to index
    %c0_25 = arith.constant 0 : index
    %88 = vector.load %arg4[%87, %c0_25] : memref<8x32xf32, #tpu.memory_space<vmem>>, vector<1x32xf32>
    tpu.vector_store %arg4[%87, %c0_25], %86 {strides = array<i32>} : memref<8x32xf32, #tpu.memory_space<vmem>>, vector<1x32xf32>,
    %c3_i32 = arith.constant 3 : i32
    %89 = arith.index_cast %c3_i32 : i32 to index
    %c0_26 = arith.constant 0 : index
    %90 = vector.load %arg5[%89, %c0_26] : memref<8x128xf32, #tpu.memory_space<vmem>>, vector<1x128xf32>
    %cst_27 = arith.constant dense<0.000000e+00> : vector<1x128xf32>
    %91 = tpu.matmul %86, %23, %cst_27 {dimension_numbers = #tpu.dot_dimension_numbers<[1], [0], [0], [1], [0, 0, 1, 1], [], []>} : vector<1x32xf32>, vector<32x128xf32>, vector<1x128xf32> -> vector<1x128xf32>
    %92 = arith.addf %90, %91 : vector<1x128xf32>
    %93 = arith.negf %92 : vector<1x128xf32>
    %94 = math.exp %93 : vector<1x128xf32>
    %cst_28 = arith.constant 1.000000e+00 : f32
    %95 = vector.broadcast %cst_28 : f32 to vector<1x128xf32>
    %96 = arith.addf %95, %94 : vector<1x128xf32>
    %97 = arith.divf %95, %96 : vector<1x128xf32>
    %98 = vector.extract_strided_slice %97 {offsets = [0, 0], sizes = [1, 32], strides = [1, 1]} : vector<1x128xf32> to vector<1x32xf32>
    %99 = vector.extract_strided_slice %97 {offsets = [0, 32], sizes = [1, 32], strides = [1, 1]} : vector<1x128xf32> to vector<1x32xf32>
    %100 = vector.extract_strided_slice %97 {offsets = [0, 64], sizes = [1, 32], strides = [1, 1]} : vector<1x128xf32> to vector<1x32xf32>
    %101 = vector.extract_strided_slice %92 {offsets = [0, 96], sizes = [1, 32], strides = [1, 1]} : vector<1x128xf32> to vector<1x32xf32>
    %102 = math.tanh %101 : vector<1x32xf32>
    %103 = arith.mulf %99, %84 : vector<1x32xf32>
    %104 = arith.mulf %98, %102 : vector<1x32xf32>
    %105 = arith.addf %103, %104 : vector<1x32xf32>
    %106 = math.tanh %105 : vector<1x32xf32>
    %107 = arith.mulf %100, %106 : vector<1x32xf32>
    %108 = arith.index_cast %c3_i32 : i32 to index
    %c0_29 = arith.constant 0 : index
    %109 = vector.load %arg4[%108, %c0_29] : memref<8x32xf32, #tpu.memory_space<vmem>>, vector<1x32xf32>
    tpu.vector_store %arg4[%108, %c0_29], %107 {strides = array<i32>} : memref<8x32xf32, #tpu.memory_space<vmem>>, vector<1x32xf32>,
    %c4_i32 = arith.constant 4 : i32
    %110 = arith.index_cast %c4_i32 : i32 to index
    %c0_30 = arith.constant 0 : index
    %111 = vector.load %arg5[%110, %c0_30] : memref<8x128xf32, #tpu.memory_space<vmem>>, vector<1x128xf32>
    %cst_31 = arith.constant dense<0.000000e+00> : vector<1x128xf32>
    %112 = tpu.matmul %107, %23, %cst_31 {dimension_numbers = #tpu.dot_dimension_numbers<[1], [0], [0], [1], [0, 0, 1, 1], [], []>} : vector<1x32xf32>, vector<32x128xf32>, vector<1x128xf32> -> vector<1x128xf32>
    %113 = arith.addf %111, %112 : vector<1x128xf32>
    %114 = arith.negf %113 : vector<1x128xf32>
    %115 = math.exp %114 : vector<1x128xf32>
    %cst_32 = arith.constant 1.000000e+00 : f32
    %116 = vector.broadcast %cst_32 : f32 to vector<1x128xf32>
    %117 = arith.addf %116, %115 : vector<1x128xf32>
    %118 = arith.divf %116, %117 : vector<1x128xf32>
    %119 = vector.extract_strided_slice %118 {offsets = [0, 0], sizes = [1, 32], strides = [1, 1]} : vector<1x128xf32> to vector<1x32xf32>
    %120 = vector.extract_strided_slice %118 {offsets = [0, 32], sizes = [1, 32], strides = [1, 1]} : vector<1x128xf32> to vector<1x32xf32>
    %121 = vector.extract_strided_slice %118 {offsets = [0, 64], sizes = [1, 32], strides = [1, 1]} : vector<1x128xf32> to vector<1x32xf32>
    %122 = vector.extract_strided_slice %113 {offsets = [0, 96], sizes = [1, 32], strides = [1, 1]} : vector<1x128xf32> to vector<1x32xf32>
    %123 = math.tanh %122 : vector<1x32xf32>
    %124 = arith.mulf %120, %105 : vector<1x32xf32>
    %125 = arith.mulf %119, %123 : vector<1x32xf32>
    %126 = arith.addf %124, %125 : vector<1x32xf32>
    %127 = math.tanh %126 : vector<1x32xf32>
    %128 = arith.mulf %121, %127 : vector<1x32xf32>
    %129 = arith.index_cast %c4_i32 : i32 to index
    %c0_33 = arith.constant 0 : index
    %130 = vector.load %arg4[%129, %c0_33] : memref<8x32xf32, #tpu.memory_space<vmem>>, vector<1x32xf32>
    tpu.vector_store %arg4[%129, %c0_33], %128 {strides = array<i32>} : memref<8x32xf32, #tpu.memory_space<vmem>>, vector<1x32xf32>,
    %c5_i32 = arith.constant 5 : i32
    %131 = arith.index_cast %c5_i32 : i32 to index
    %c0_34 = arith.constant 0 : index
    %132 = vector.load %arg5[%131, %c0_34] : memref<8x128xf32, #tpu.memory_space<vmem>>, vector<1x128xf32>
    %cst_35 = arith.constant dense<0.000000e+00> : vector<1x128xf32>
    %133 = tpu.matmul %128, %23, %cst_35 {dimension_numbers = #tpu.dot_dimension_numbers<[1], [0], [0], [1], [0, 0, 1, 1], [], []>} : vector<1x32xf32>, vector<32x128xf32>, vector<1x128xf32> -> vector<1x128xf32>
    %134 = arith.addf %132, %133 : vector<1x128xf32>
    %135 = arith.negf %134 : vector<1x128xf32>
    %136 = math.exp %135 : vector<1x128xf32>
    %cst_36 = arith.constant 1.000000e+00 : f32
    %137 = vector.broadcast %cst_36 : f32 to vector<1x128xf32>
    %138 = arith.addf %137, %136 : vector<1x128xf32>
    %139 = arith.divf %137, %138 : vector<1x128xf32>
    %140 = vector.extract_strided_slice %139 {offsets = [0, 0], sizes = [1, 32], strides = [1, 1]} : vector<1x128xf32> to vector<1x32xf32>
    %141 = vector.extract_strided_slice %139 {offsets = [0, 32], sizes = [1, 32], strides = [1, 1]} : vector<1x128xf32> to vector<1x32xf32>
    %142 = vector.extract_strided_slice %139 {offsets = [0, 64], sizes = [1, 32], strides = [1, 1]} : vector<1x128xf32> to vector<1x32xf32>
    %143 = vector.extract_strided_slice %134 {offsets = [0, 96], sizes = [1, 32], strides = [1, 1]} : vector<1x128xf32> to vector<1x32xf32>
    %144 = math.tanh %143 : vector<1x32xf32>
    %145 = arith.mulf %141, %126 : vector<1x32xf32>
    %146 = arith.mulf %140, %144 : vector<1x32xf32>
    %147 = arith.addf %145, %146 : vector<1x32xf32>
    %148 = math.tanh %147 : vector<1x32xf32>
    %149 = arith.mulf %142, %148 : vector<1x32xf32>
    %150 = arith.index_cast %c5_i32 : i32 to index
    %c0_37 = arith.constant 0 : index
    %151 = vector.load %arg4[%150, %c0_37] : memref<8x32xf32, #tpu.memory_space<vmem>>, vector<1x32xf32>
    tpu.vector_store %arg4[%150, %c0_37], %149 {strides = array<i32>} : memref<8x32xf32, #tpu.memory_space<vmem>>, vector<1x32xf32>,
    %c6_i32 = arith.constant 6 : i32
    %152 = arith.index_cast %c6_i32 : i32 to index
    %c0_38 = arith.constant 0 : index
    %153 = vector.load %arg5[%152, %c0_38] : memref<8x128xf32, #tpu.memory_space<vmem>>, vector<1x128xf32>
    %cst_39 = arith.constant dense<0.000000e+00> : vector<1x128xf32>
    %154 = tpu.matmul %149, %23, %cst_39 {dimension_numbers = #tpu.dot_dimension_numbers<[1], [0], [0], [1], [0, 0, 1, 1], [], []>} : vector<1x32xf32>, vector<32x128xf32>, vector<1x128xf32> -> vector<1x128xf32>
    %155 = arith.addf %153, %154 : vector<1x128xf32>
    %156 = arith.negf %155 : vector<1x128xf32>
    %157 = math.exp %156 : vector<1x128xf32>
    %cst_40 = arith.constant 1.000000e+00 : f32
    %158 = vector.broadcast %cst_40 : f32 to vector<1x128xf32>
    %159 = arith.addf %158, %157 : vector<1x128xf32>
    %160 = arith.divf %158, %159 : vector<1x128xf32>
    %161 = vector.extract_strided_slice %160 {offsets = [0, 0], sizes = [1, 32], strides = [1, 1]} : vector<1x128xf32> to vector<1x32xf32>
    %162 = vector.extract_strided_slice %160 {offsets = [0, 32], sizes = [1, 32], strides = [1, 1]} : vector<1x128xf32> to vector<1x32xf32>
    %163 = vector.extract_strided_slice %160 {offsets = [0, 64], sizes = [1, 32], strides = [1, 1]} : vector<1x128xf32> to vector<1x32xf32>
    %164 = vector.extract_strided_slice %155 {offsets = [0, 96], sizes = [1, 32], strides = [1, 1]} : vector<1x128xf32> to vector<1x32xf32>
    %165 = math.tanh %164 : vector<1x32xf32>
    %166 = arith.mulf %162, %147 : vector<1x32xf32>
    %167 = arith.mulf %161, %165 : vector<1x32xf32>
    %168 = arith.addf %166, %167 : vector<1x32xf32>
    %169 = math.tanh %168 : vector<1x32xf32>
    %170 = arith.mulf %163, %169 : vector<1x32xf32>
    %171 = arith.index_cast %c6_i32 : i32 to index
    %c0_41 = arith.constant 0 : index
    %172 = vector.load %arg4[%171, %c0_41] : memref<8x32xf32, #tpu.memory_space<vmem>>, vector<1x32xf32>
    tpu.vector_store %arg4[%171, %c0_41], %170 {strides = array<i32>} : memref<8x32xf32, #tpu.memory_space<vmem>>, vector<1x32xf32>,
    %c7_i32 = arith.constant 7 : i32
    %173 = arith.index_cast %c7_i32 : i32 to index
    %c0_42 = arith.constant 0 : index
    %174 = vector.load %arg5[%173, %c0_42] : memref<8x128xf32, #tpu.memory_space<vmem>>, vector<1x128xf32>
    %cst_43 = arith.constant dense<0.000000e+00> : vector<1x128xf32>
    %175 = tpu.matmul %170, %23, %cst_43 {dimension_numbers = #tpu.dot_dimension_numbers<[1], [0], [0], [1], [0, 0, 1, 1], [], []>} : vector<1x32xf32>, vector<32x128xf32>, vector<1x128xf32> -> vector<1x128xf32>
    %176 = arith.addf %174, %175 : vector<1x128xf32>
    %177 = arith.negf %176 : vector<1x128xf32>
    %178 = math.exp %177 : vector<1x128xf32>
    %cst_44 = arith.constant 1.000000e+00 : f32
    %179 = vector.broadcast %cst_44 : f32 to vector<1x128xf32>
    %180 = arith.addf %179, %178 : vector<1x128xf32>
    %181 = arith.divf %179, %180 : vector<1x128xf32>
    %182 = vector.extract_strided_slice %181 {offsets = [0, 0], sizes = [1, 32], strides = [1, 1]} : vector<1x128xf32> to vector<1x32xf32>
    %183 = vector.extract_strided_slice %181 {offsets = [0, 32], sizes = [1, 32], strides = [1, 1]} : vector<1x128xf32> to vector<1x32xf32>
    %184 = vector.extract_strided_slice %181 {offsets = [0, 64], sizes = [1, 32], strides = [1, 1]} : vector<1x128xf32> to vector<1x32xf32>
    %185 = vector.extract_strided_slice %176 {offsets = [0, 96], sizes = [1, 32], strides = [1, 1]} : vector<1x128xf32> to vector<1x32xf32>
    %186 = math.tanh %185 : vector<1x32xf32>
    %187 = arith.mulf %183, %168 : vector<1x32xf32>
    %188 = arith.mulf %182, %186 : vector<1x32xf32>
    %189 = arith.addf %187, %188 : vector<1x32xf32>
    %190 = math.tanh %189 : vector<1x32xf32>
    %191 = arith.mulf %184, %190 : vector<1x32xf32>
    %192 = arith.index_cast %c7_i32 : i32 to index
    %c0_45 = arith.constant 0 : index
    %193 = vector.load %arg4[%192, %c0_45] : memref<8x32xf32, #tpu.memory_space<vmem>>, vector<1x32xf32>
    tpu.vector_store %arg4[%192, %c0_45], %191 {strides = array<i32>} : memref<8x32xf32, #tpu.memory_space<vmem>>, vector<1x32xf32>,
    %c8_i32 = arith.constant 8 : i32
    %c0_46 = arith.constant 0 : index
    %c0_47 = arith.constant 0 : index
    %194 = vector.load %arg4[%c0_46, %c0_47] : memref<8x32xf32, #tpu.memory_space<vmem>>, vector<8x32xf32>
    %195 = vector.broadcast %9 : f32 to vector<8x32xf32>
    %196 = arith.mulf %194, %195 : vector<8x32xf32>
    %197 = vector.broadcast %4 : f32 to vector<8x32xf32>
    %198 = arith.addf %196, %197 : vector<8x32xf32>
    %c0_48 = arith.constant 0 : index
    %c0_49 = arith.constant 0 : index
    %199 = vector.load %arg4[%c0_48, %c0_49] : memref<8x32xf32, #tpu.memory_space<vmem>>, vector<8x32xf32>
    tpu.vector_store %arg4[%c0_48, %c0_49], %198 {strides = array<i32>} : memref<8x32xf32, #tpu.memory_space<vmem>>, vector<8x32xf32>,
    return
  }
}

</mosaic_0001>

<llo_original>
// kernel: ecgi_temporal_forward.1
$region0: #{ecgi_temporal_forward.1}
  #allocation0 [shape = 'u32[]', space=smem, size = 0x4, offset = 0x4, fixed_abs, tag = 'smem constant byte address 0x4 - core index']
  #allocation1 [shape = 'u32[144,128]{1,0:T(1,128)}', space=vmem, size = 0x12000, scoped, tag = 'internal scratch']
  #allocation2 [shape = 'f32[8,128]{1,0:T(8,128)}', space=vmem, size = 0x1000, scoped, tag = 'scratch operand']
  %s0 = inlined_call_operand.vmem [shape: f32[8,32], index: 0, kind: input, shape index: {}]
  %s1 = inlined_call_operand.vmem [shape: f32[32,128], index: 1, kind: input, shape index: {}]
  %s2 = inlined_call_operand.vmem [shape: f32[32,128], index: 2, kind: input, shape index: {}]
  %s3 = inlined_call_operand.vmem [shape: f32[1,128], index: 3, kind: input, shape index: {}]
  %s4 = inlined_call_operand.hbm [shape: f32[8,32], index: 4, kind: output, shape index: {}]
  %s5 = sld [smem:[#allocation0]]
  $region26: #{ecgi_temporal_forward.1} parent=0
    _
  %s7 = ssub.s32 1, %s5
  %s8 = scalar_select 0, %s7, %s5
  $region1: #{ecgi_temporal_forward.1} parent=0
    #allocation3 [shape = 'u8[4096]{0}', space=vmem, size = 0x1000, scoped, tag = 'output window, operand 0, single buffered']
    #allocation4 [shape = 's32[1]{0}', space=sflag, size = 0x4, scoped, tag = 'scoped memory for ecgi_temporal_forward.1']
    %9 = vsyncpa [#allocation4], 0
    // Predicated region
    $region2: #{ecgi_temporal_forward.1} parent=1 // pred_check
      _
    $region3: #{ecgi_temporal_forward.1} parent=1 // pred_check_branch
      %11 = sbr.rel (0) target = $region5
    $region4: #{ecgi_temporal_forward.1} parent=1 // pred_region
      _
    $region5: #{ecgi_temporal_forward.1} parent=1 // pred_fallthru
      _
    // Predicated region
    $region6: #{ecgi_temporal_forward.1} parent=1 // pred_check
      _
    $region7: #{ecgi_temporal_forward.1} parent=1 // pred_check_branch
      %13 = sbr.rel (0) target = $region9
    $region8: #{ecgi_temporal_forward.1} parent=1 // pred_region
      _
    $region9: #{ecgi_temporal_forward.1} parent=1 // pred_fallthru
      _
    // Predicated region
    $region10: #{ecgi_temporal_forward.1} parent=1 // pred_check
      _
    $region11: #{ecgi_temporal_forward.1} parent=1 // pred_check_branch
      %15 = sbr.rel (0) target = $region13
    $region12: #{ecgi_temporal_forward.1} parent=1 // pred_region
      _
    $region13: #{ecgi_temporal_forward.1} parent=1 // pred_fallthru
      _
    // Predicated region
    $region14: #{ecgi_temporal_forward.1} parent=1 // pred_check
      _
    $region15: #{ecgi_temporal_forward.1} parent=1 // pred_check_branch
      %17 = sbr.rel (0) target = $region17
    $region16: #{ecgi_temporal_forward.1} parent=1 // pred_region
      _
    $region17: #{ecgi_temporal_forward.1} parent=1 // pred_fallthru
      _
    %v18 = vld [vmem:[%s0] sm:$0xff]
    %vm19 = vcmask 261120
    %v20 = vsel %vm19, %v18, inf
    %21 = vmin.xlane.f32.xlu0 %v20
    %v22 = vpop.xlane.xlu0 %21
    %v23 = vrot.slane %v22, 4
    %v24 = vmin.f32 %v22, %v23
    %v25 = vrot.slane %v24, 2
    %v26 = vmin.f32 %v24, %v25
    %v27 = vrot.slane %v26, 1
    %v28 = vmin.f32 %v26, %v27
    %s29 = vtos %v28
    %v30 = vsel %vm19, %v18, -inf
    %31 = vmax.xlane.f32.xlu0 %v30
    %v32 = vpop.xlane.xlu0 %31
    %v33 = vrot.slane %v32, 4
    %v34 = vmax.f32 %v32, %v33
    %v35 = vrot.slane %v34, 2
    %v36 = vmax.f32 %v34, %v35
    %v37 = vrot.slane %v36, 1
    %v38 = vmax.f32 %v36, %v37
    %s39 = vtos %v38
    %s40 = ssub.f32 %s39, %s29
    %v41 = vstv %s29
    %v42 = vsub.f32 %v18, %v41
    %v43 = vstv %s40
    %v44 = vrcp.pop %v43
    %v45 = vmul.f32 %v42, %v44
    %vm46 = vcmp.ne.f32.partialorder %v45, %v45
    %v47 = vsel %vm46, 0.0, %v45
    %v48 = vld [vmem:[%s1] sm:$0xff]
    %v49 = vld [vmem:[%s1 + $0x8] sm:$0xff]
    %v50 = vld [vmem:[%s1 + $0x10] sm:$0xff]
    %v51 = vld [vmem:[%s1 + $0x18] sm:$0xff]
    %v52 = vld [vmem:[%s3] sm:$0x1]
    %v54 = vlaneseq
    %v55 = vshrl.u32 %v54, 7
    %v56 = vsub.s32 0, %v55
    %v57 = vrot.slane %v52, %v56
    %v60 = vsel %vm19, %v47, 0
    %62 = vmatprep.subr.mxu0 0.0
    %63 = vmatpush1.msra.mxu0 0.0
    %64 = vmatprep.subr.mxu0 0.0
    %65 = vmatpush1.msra.mxu0 0.0
    %66 = vmatprep.subr.mxu0 0.0
    %67 = vmatpush1.msra.mxu0 0.0
    %68 = vmatprep.subr.mxu0 0.0
    %69 = vmatpush1.msra.mxu0 0.0
    %70 = vmatprep.subr.mxu0 0.0
    %71 = vmatpush1.msra.mxu0 0.0
    %72 = vmatprep.subr.mxu0 0.0
    %73 = vmatpush1.msra.mxu0 0.0
    %74 = vmatprep.subr.mxu0 0.0
    %75 = vmatpush1.msra.mxu0 0.0
    %76 = vmatprep.subr.mxu0 0.0
    %77 = vmatpush1.msra.mxu0 0.0
    %78 = vmatprep.subr.mxu0 0.0
    %79 = vmatpush1.msra.mxu0 0.0
    %80 = vmatprep.subr.mxu0 0.0
    %81 = vmatpush1.msra.mxu0 0.0
    %82 = vmatprep.subr.mxu0 0.0
    %83 = vmatpush1.msra.mxu0 0.0
    %84 = vmatprep.subr.mxu0 0.0
    %85 = vmatpush1.msra.mxu0 0.0
    %86 = vmatprep.subr.mxu0 0.0
    %87 = vmatpush1.msra.mxu0 %v51
    %88 = vmatprep.subr.mxu0 0.0
    %89 = vmatpush1.msra.mxu0 %v50
    %90 = vmatprep.subr.mxu0 0.0
    %91 = vmatpush1.msra.mxu0 %v49
    %92 = vmatprep.subr.mxu0 0.0
    %93 = vmatpush1.msra.mxu0 %v48
    %94 = vmatprep.subr.mxu0 0.0
    %95 = vmatpush2.msra.mxu0 0.0
    %96 = vmatprep.subr.mxu0 0.0
    %97 = vmatpush2.msra.mxu0 0.0
    %98 = vmatprep.subr.mxu0 0.0
    %99 = vmatpush2.msra.mxu0 0.0
    %100 = vmatprep.subr.mxu0 0.0
    %101 = vmatpush2.msra.mxu0 0.0
    %102 = vmatprep.subr.mxu0 0.0
    %103 = vmatpush2.msra.mxu0 0.0
    %104 = vmatprep.subr.mxu0 0.0
    %105 = vmatpush2.msra.mxu0 0.0
    %106 = vmatprep.subr.mxu0 0.0
    %107 = vmatpush2.msra.mxu0 0.0
    %108 = vmatprep.subr.mxu0 0.0
    %109 = vmatpush2.msra.mxu0 0.0
    %110 = vmatprep.subr.mxu0 0.0
    %111 = vmatpush2.msra.mxu0 0.0
    %112 = vmatprep.subr.mxu0 0.0
    %113 = vmatpush2.msra.mxu0 0.0
    %114 = vmatprep.subr.mxu0 0.0
    %115 = vmatpush2.msra.mxu0 0.0
    %116 = vmatprep.subr.mxu0 0.0
    %117 = vmatpush2.msra.mxu0 0.0
    %118 = vmatprep.subr.mxu0 0.0
    %119 = vmatpush2.msra.mxu0 0.0
    %120 = vmatprep.subr.mxu0 0.0
    %121 = vmatpush2.msra.mxu0 0.0
    %122 = vmatprep.subr.mxu0 0.0
    %123 = vmatpush2.msra.mxu0 0.0
    %124 = vmatprep.subr.mxu0 0.0
    %125 = vmatpush2.msra.mxu0 0.0
    %126 = vmatprep.mubr.f32.mxu0 0.0
    %127 = vmatmul.mubr.f32.gmra.mxu0 %v60
    %v128 = vpop.f32.mrf.mxu0
    %v129 = vadd.f32 %v57, %v128
    %v130 = vpop.f32.mrf.mxu0
    %131 = vdwg.mxu0
    %132 = vst [vmem:[#allocation2] sm:$0xff] %v129
    %v133 = vld [vmem:[%s2] sm:$0xff]
    %v134 = vld [vmem:[%s2 + $0x8] sm:$0xff]
    %v135 = vld [vmem:[%s2 + $0x10] sm:$0xff]
    %v136 = vld [vmem:[%s2 + $0x18] sm:$0xff]
    %v137 = vld [vmem:[#allocation2] sm:$0x1]
    %v139 = vsel %vm19, 0.0, 0
    %141 = vmatprep.subr.mxu0 0.0
    %142 = vmatpush1.msra.mxu0 0.0
    %143 = vmatprep.subr.mxu0 0.0
    %144 = vmatpush1.msra.mxu0 0.0
    %145 = vmatprep.subr.mxu0 0.0
    %146 = vmatpush1.msra.mxu0 0.0
    %147 = vmatprep.subr.mxu0 0.0
    %148 = vmatpush1.msra.mxu0 0.0
    %149 = vmatprep.subr.mxu0 0.0
    %150 = vmatpush1.msra.mxu0 0.0
    %151 = vmatprep.subr.mxu0 0.0
    %152 = vmatpush1.msra.mxu0 0.0
    %153 = vmatprep.subr.mxu0 0.0
    %154 = vmatpush1.msra.mxu0 0.0
    %155 = vmatprep.subr.mxu0 0.0
    %156 = vmatpush1.msra.mxu0 0.0
    %157 = vmatprep.subr.mxu0 0.0
    %158 = vmatpush1.msra.mxu0 0.0
    %159 = vmatprep.subr.mxu0 0.0
    %160 = vmatpush1.msra.mxu0 0.0
    %161 = vmatprep.subr.mxu0 0.0
    %162 = vmatpush1.msra.mxu0 0.0
    %163 = vmatprep.subr.mxu0 0.0
    %164 = vmatpush1.msra.mxu0 0.0
    %165 = vmatprep.subr.mxu0 0.0
    %166 = vmatpush1.msra.mxu0 %v136
    %167 = vmatprep.subr.mxu0 0.0
    %168 = vmatpush1.msra.mxu0 %v135
    %169 = vmatprep.subr.mxu0 0.0
    %170 = vmatpush1.msra.mxu0 %v134
    %171 = vmatprep.subr.mxu0 0.0
    %172 = vmatpush1.msra.mxu0 %v133
    %173 = vmatprep.subr.mxu0 0.0
    %174 = vmatpush2.msra.mxu0 0.0
    %175 = vmatprep.subr.mxu0 0.0
    %176 = vmatpush2.msra.mxu0 0.0
    %177 = vmatprep.subr.mxu0 0.0
    %178 = vmatpush2.msra.mxu0 0.0
    %179 = vmatprep.subr.mxu0 0.0
    %180 = vmatpush2.msra.mxu0 0.0
    %181 = vmatprep.subr.mxu0 0.0
    %182 = vmatpush2.msra.mxu0 0.0
    %183 = vmatprep.subr.mxu0 0.0
    %184 = vmatpush2.msra.mxu0 0.0
    %185 = vmatprep.subr.mxu0 0.0
    %186 = vmatpush2.msra.mxu0 0.0
    %187 = vmatprep.subr.mxu0 0.0
    %188 = vmatpush2.msra.mxu0 0.0
    %189 = vmatprep.subr.mxu0 0.0
    %190 = vmatpush2.msra.mxu0 0.0
    %191 = vmatprep.subr.mxu0 0.0
    %192 = vmatpush2.msra.mxu0 0.0
    %193 = vmatprep.subr.mxu0 0.0
    %194 = vmatpush2.msra.mxu0 0.0
    %195 = vmatprep.subr.mxu0 0.0
    %196 = vmatpush2.msra.mxu0 0.0
    %197 = vmatprep.subr.mxu0 0.0
    %198 = vmatpush2.msra.mxu0 0.0
    %199 = vmatprep.subr.mxu0 0.0
    %200 = vmatpush2.msra.mxu0 0.0
    %201 = vmatprep.subr.mxu0 0.0
    %202 = vmatpush2.msra.mxu0 0.0
    %203 = vmatprep.subr.mxu0 0.0
    %204 = vmatpush2.msra.mxu0 0.0
    %205 = vmatprep.mubr.f32.mxu0 0.0
    %206 = vmatmul.mubr.f32.gmra.mxu0 %v139
    %v207 = vpop.f32.mrf.mxu0
    %v208 = vadd.f32 0.0, %v207
    %v209 = vpop.f32.mrf.mxu0
    %210 = vdwg.mxu0
    %v211 = vadd.f32 %v137, %v208
    %v212 = vxor.u32 %v211, 2147483648
    %v213 = vmul.f32 %v212, 1.442695
    %v214 = vpow.pop %v213
    %v215 = vadd.f32 %v214, 1.0
    %v216 = vrcp.pop %v215
    %v217 = vmul.f32 1.0, %v216
    %v218 = vtanh.pop %v211
    %v219 = vmul.f32 %v217, 0.0
    %221 = vrot.lane.b32.xlu0 %v218, 32
    %v222 = vpop.permute.xlu0 %221
    %v224 = vmul.f32 %v217, %v222
    %226 = vrot.lane.b32.xlu0 %v224, 32
    %v227 = vpop.permute.xlu0 %226
    %v229 = vadd.f32 %v219, %v227
    %v230 = vtanh.pop %v229
    %232 = vrot.lane.b32.xlu0 %v230, 32
    %v233 = vpop.permute.xlu0 %232
    %v235 = vmul.f32 %v217, %v233
    %237 = vrot.lane.b32.xlu0 %v235, 64
    %v238 = vpop.permute.xlu0 %237
    %vm240 = vcmask 253952
    %241 = vst.msk [vmem:[#allocation3] sm:$0x1] %vm240, %v238
    %v242 = vld [vmem:[#allocation2 + $0x1] sm:$0x1]
    %v243 = vsel %vm19, %v238, 0
    %245 = vmatprep.subr.mxu0 0.0
    %246 = vmatpush1.msra.mxu0 0.0
    %247 = vmatprep.subr.mxu0 0.0
    %248 = vmatpush1.msra.mxu0 0.0
    %249 = vmatprep.subr.mxu0 0.0
    %250 = vmatpush1.msra.mxu0 0.0
    %251 = vmatprep.subr.mxu0 0.0
    %252 = vmatpush1.msra.mxu0 0.0
    %253 = vmatprep.subr.mxu0 0.0
    %254 = vmatpush1.msra.mxu0 0.0
    %255 = vmatprep.subr.mxu0 0.0
    %256 = vmatpush1.msra.mxu0 0.0
    %257 = vmatprep.subr.mxu0 0.0
    %258 = vmatpush1.msra.mxu0 0.0
    %259 = vmatprep.subr.mxu0 0.0
    %260 = vmatpush1.msra.mxu0 0.0
    %261 = vmatprep.subr.mxu0 0.0
    %262 = vmatpush1.msra.mxu0 0.0
    %263 = vmatprep.subr.mxu0 0.0
    %264 = vmatpush1.msra.mxu0 0.0
    %265 = vmatprep.subr.mxu0 0.0
    %266 = vmatpush1.msra.mxu0 0.0
    %267 = vmatprep.subr.mxu0 0.0
    %268 = vmatpush1.msra.mxu0 0.0
    %269 = vmatprep.subr.mxu0 0.0
    %270 = vmatpush1.msra.mxu0 %v136
    %271 = vmatprep.subr.mxu0 0.0
    %272 = vmatpush1.msra.mxu0 %v135
    %273 = vmatprep.subr.mxu0 0.0
    %274 = vmatpush1.msra.mxu0 %v134
    %275 = vmatprep.subr.mxu0 0.0
    %276 = vmatpush1.msra.mxu0 %v133
    %277 = vmatprep.subr.mxu0 0.0
    %278 = vmatpush2.msra.mxu0 0.0
    %279 = vmatprep.subr.mxu0 0.0
    %280 = vmatpush2.msra.mxu0 0.0
    %281 = vmatprep.subr.mxu0 0.0
    %282 = vmatpush2.msra.mxu0 0.0
    %283 = vmatprep.subr.mxu0 0.0
    %284 = vmatpush2.msra.mxu0 0.0
    %285 = vmatprep.subr.mxu0 0.0
    %286 = vmatpush2.msra.mxu0 0.0
    %287 = vmatprep.subr.mxu0 0.0
    %288 = vmatpush2.msra.mxu0 0.0
    %289 = vmatprep.subr.mxu0 0.0
    %290 = vmatpush2.msra.mxu0 0.0
    %291 = vmatprep.subr.mxu0 0.0
    %292 = vmatpush2.msra.mxu0 0.0
    %293 = vmatprep.subr.mxu0 0.0
    %294 = vmatpush2.msra.mxu0 0.0
    %295 = vmatprep.subr.mxu0 0.0
    %296 = vmatpush2.msra.mxu0 0.0
    %297 = vmatprep.subr.mxu0 0.0
    %298 = vmatpush2.msra.mxu0 0.0
    %299 = vmatprep.subr.mxu0 0.0
    %300 = vmatpush2.msra.mxu0 0.0
    %301 = vmatprep.subr.mxu0 0.0
    %302 = vmatpush2.msra.mxu0 0.0
    %303 = vmatprep.subr.mxu0 0.0
    %304 = vmatpush2.msra.mxu0 0.0
    %305 = vmatprep.subr.mxu0 0.0
    %306 = vmatpush2.msra.mxu0 0.0
    %307 = vmatprep.subr.mxu0 0.0
    %308 = vmatpush2.msra.mxu0 0.0
    %309 = vmatprep.mubr.f32.mxu0 0.0
    %310 = vmatmul.mubr.f32.gmra.mxu0 %v243
    %v311 = vpop.f32.mrf.mxu0
    %v312 = vadd.f32 0.0, %v311
    %v313 = vpop.f32.mrf.mxu0
    %314 = vdwg.mxu0
    %v315 = vadd.f32 %v242, %v312
    %v316 = vxor.u32 %v315, 2147483648
    %v317 = vmul.f32 %v316, 1.442695
    %v318 = vpow.pop %v317
    %v319 = vadd.f32 %v318, 1.0
    %v320 = vrcp.pop %v319
    %v321 = vmul.f32 1.0, %v320
    %v322 = vtanh.pop %v315
    %v323 = vmul.f32 %v321, %v229
    %325 = vrot.lane.b32.xlu0 %v322, 32
    %v326 = vpop.permute.xlu0 %325
    %v328 = vmul.f32 %v321, %v326
    %330 = vrot.lane.b32.xlu0 %v328, 32
    %v331 = vpop.permute.xlu0 %330
    %v333 = vadd.f32 %v323, %v331
    %v334 = vtanh.pop %v333
    %336 = vrot.lane.b32.xlu0 %v334, 32
    %v337 = vpop.permute.xlu0 %336
    %v339 = vmul.f32 %v321, %v337
    %341 = vrot.lane.b32.xlu0 %v339, 64
    %v342 = vpop.permute.xlu0 %341
    %344 = vst.msk [vmem:[#allocation3 + $0x1] sm:$0x1] %vm240, %v342
    %v345 = vld [vmem:[#allocation2 + $0x2] sm:$0x1]
    %v346 = vsel %vm19, %v342, 0
    %348 = vmatprep.subr.mxu0 0.0
    %349 = vmatpush1.msra.mxu0 0.0
    %350 = vmatprep.subr.mxu0 0.0
    %351 = vmatpush1.msra.mxu0 0.0
    %352 = vmatprep.subr.mxu0 0.0
    %353 = vmatpush1.msra.mxu0 0.0
    %354 = vmatprep.subr.mxu0 0.0
    %355 = vmatpush1.msra.mxu0 0.0
    %356 = vmatprep.subr.mxu0 0.0
    %357 = vmatpush1.msra.mxu0 0.0
    %358 = vmatprep.subr.mxu0 0.0
    %359 = vmatpush1.msra.mxu0 0.0
    %360 = vmatprep.subr.mxu0 0.0
    %361 = vmatpush1.msra.mxu0 0.0
    %362 = vmatprep.subr.mxu0 0.0
    %363 = vmatpush1.msra.mxu0 0.0
    %364 = vmatprep.subr.mxu0 0.0
    %365 = vmatpush1.msra.mxu0 0.0
    %366 = vmatprep.subr.mxu0 0.0
    %367 = vmatpush1.msra.mxu0 0.0
    %368 = vmatprep.subr.mxu0 0.0
    %369 = vmatpush1.msra.mxu0 0.0
    %370 = vmatprep.subr.mxu0 0.0
    %371 = vmatpush1.msra.mxu0 0.0
    %372 = vmatprep.subr.mxu0 0.0
    %373 = vmatpush1.msra.mxu0 %v136
    %374 = vmatprep.subr.mxu0 0.0
    %375 = vmatpush1.msra.mxu0 %v135
    %376 = vmatprep.subr.mxu0 0.0
    %377 = vmatpush1.msra.mxu0 %v134
    %378 = vmatprep.subr.mxu0 0.0
    %379 = vmatpush1.msra.mxu0 %v133
    %380 = vmatprep.subr.mxu0 0.0
    %381 = vmatpush2.msra.mxu0 0.0
    %382 = vmatprep.subr.mxu0 0.0
    %383 = vmatpush2.msra.mxu0 0.0
    %384 = vmatprep.subr.mxu0 0.0
    %385 = vmatpush2.msra.mxu0 0.0
    %386 = vmatprep.subr.mxu0 0.0
    %387 = vmatpush2.msra.mxu0 0.0
    %388 = vmatprep.subr.mxu0 0.0
    %389 = vmatpush2.msra.mxu0 0.0
    %390 = vmatprep.subr.mxu0 0.0
    %391 = vmatpush2.msra.mxu0 0.0
    %392 = vmatprep.subr.mxu0 0.0
    %393 = vmatpush2.msra.mxu0 0.0
    %394 = vmatprep.subr.mxu0 0.0
    %395 = vmatpush2.msra.mxu0 0.0
    %396 = vmatprep.subr.mxu0 0.0
    %397 = vmatpush2.msra.mxu0 0.0
    %398 = vmatprep.subr.mxu0 0.0
    %399 = vmatpush2.msra.mxu0 0.0
    %400 = vmatprep.subr.mxu0 0.0
    %401 = vmatpush2.msra.mxu0 0.0
    %402 = vmatprep.subr.mxu0 0.0
    %403 = vmatpush2.msra.mxu0 0.0
    %404 = vmatprep.subr.mxu0 0.0
    %405 = vmatpush2.msra.mxu0 0.0
    %406 = vmatprep.subr.mxu0 0.0
    %407 = vmatpush2.msra.mxu0 0.0
    %408 = vmatprep.subr.mxu0 0.0
    %409 = vmatpush2.msra.mxu0 0.0
    %410 = vmatprep.subr.mxu0 0.0
    %411 = vmatpush2.msra.mxu0 0.0
    %412 = vmatprep.mubr.f32.mxu0 0.0
    %413 = vmatmul.mubr.f32.gmra.mxu0 %v346
    %v414 = vpop.f32.mrf.mxu0
    %v415 = vadd.f32 0.0, %v414
    %v416 = vpop.f32.mrf.mxu0
    %417 = vdwg.mxu0
    %v418 = vadd.f32 %v345, %v415
    %v419 = vxor.u32 %v418, 2147483648
    %v420 = vmul.f32 %v419, 1.442695
    %v421 = vpow.pop %v420
    %v422 = vadd.f32 %v421, 1.0
    %v423 = vrcp.pop %v422
    %v424 = vmul.f32 1.0, %v423
    %v425 = vtanh.pop %v418
    %v426 = vmul.f32 %v424, %v333
    %428 = vrot.lane.b32.xlu0 %v425, 32
    %v429 = vpop.permute.xlu0 %428
    %v431 = vmul.f32 %v424, %v429
    %433 = vrot.lane.b32.xlu0 %v431, 32
    %v434 = vpop.permute.xlu0 %433
    %v436 = vadd.f32 %v426, %v434
    %v437 = vtanh.pop %v436
    %439 = vrot.lane.b32.xlu0 %v437, 32
    %v440 = vpop.permute.xlu0 %439
    %v442 = vmul.f32 %v424, %v440
    %444 = vrot.lane.b32.xlu0 %v442, 64
    %v445 = vpop.permute.xlu0 %444
    %447 = vst.msk [vmem:[#allocation3 + $0x2] sm:$0x1] %vm240, %v445
    %v448 = vld [vmem:[#allocation2 + $0x3] sm:$0x1]
    %v449 = vsel %vm19, %v445, 0
    %451 = vmatprep.subr.mxu0 0.0
    %452 = vmatpush1.msra.mxu0 0.0
    %453 = vmatprep.subr.mxu0 0.0
    %454 = vmatpush1.msra.mxu0 0.0
    %455 = vmatprep.subr.mxu0 0.0
    %456 = vmatpush1.msra.mxu0 0.0
    %457 = vmatprep.subr.mxu0 0.0
    %458 = vmatpush1.msra.mxu0 0.0
    %459 = vmatprep.subr.mxu0 0.0
    %460 = vmatpush1.msra.mxu0 0.0
    %461 = vmatprep.subr.mxu0 0.0
    %462 = vmatpush1.msra.mxu0 0.0
    %463 = vmatprep.subr.mxu0 0.0
    %464 = vmatpush1.msra.mxu0 0.0
    %465 = vmatprep.subr.mxu0 0.0
    %466 = vmatpush1.msra.mxu0 0.0
    %467 = vmatprep.subr.mxu0 0.0
    %468 = vmatpush1.msra.mxu0 0.0
    %469 = vmatprep.subr.mxu0 0.0
    %470 = vmatpush1.msra.mxu0 0.0
    %471 = vmatprep.subr.mxu0 0.0
    %472 = vmatpush1.msra.mxu0 0.0
    %473 = vmatprep.subr.mxu0 0.0
    %474 = vmatpush1.msra.mxu0 0.0
    %475 = vmatprep.subr.mxu0 0.0
    %476 = vmatpush1.msra.mxu0 %v136
    %477 = vmatprep.subr.mxu0 0.0
    %478 = vmatpush1.msra.mxu0 %v135
    %479 = vmatprep.subr.mxu0 0.0
    %480 = vmatpush1.msra.mxu0 %v134
    %481 = vmatprep.subr.mxu0 0.0
    %482 = vmatpush1.msra.mxu0 %v133
    %483 = vmatprep.subr.mxu0 0.0
    %484 = vmatpush2.msra.mxu0 0.0
    %485 = vmatprep.subr.mxu0 0.0
    %486 = vmatpush2.msra.mxu0 0.0
    %487 = vmatprep.subr.mxu0 0.0
    %488 = vmatpush2.msra.mxu0 0.0
    %489 = vmatprep.subr.mxu0 0.0
    %490 = vmatpush2.msra.mxu0 0.0
    %491 = vmatprep.subr.mxu0 0.0
    %492 = vmatpush2.msra.mxu0 0.0
    %493 = vmatprep.subr.mxu0 0.0
    %494 = vmatpush2.msra.mxu0 0.0
    %495 = vmatprep.subr.mxu0 0.0
    %496 = vmatpush2.msra.mxu0 0.0
    %497 = vmatprep.subr.mxu0 0.0
    %498 = vmatpush2.msra.mxu0 0.0
    %499 = vmatprep.subr.mxu0 0.0
    %500 = vmatpush2.msra.mxu0 0.0
    %501 = vmatprep.subr.mxu0 0.0
    %502 = vmatpush2.msra.mxu0 0.0
    %503 = vmatprep.subr.mxu0 0.0
    %504 = vmatpush2.msra.mxu0 0.0
    %505 = vmatprep.subr.mxu0 0.0
    %506 = vmatpush2.msra.mxu0 0.0
    %507 = vmatprep.subr.mxu0 0.0
    %508 = vmatpush2.msra.mxu0 0.0
    %509 = vmatprep.subr.mxu0 0.0
    %510 = vmatpush2.msra.mxu0 0.0
    %511 = vmatprep.subr.mxu0 0.0
    %512 = vmatpush2.msra.mxu0 0.0
    %513 = vmatprep.subr.mxu0 0.0
    %514 = vmatpush2.msra.mxu0 0.0
    %515 = vmatprep.mubr.f32.mxu0 0.0
    %516 = vmatmul.mubr.f32.gmra.mxu0 %v449
    %v517 = vpop.f32.mrf.mxu0
    %v518 = vadd.f32 0.0, %v517
    %v519 = vpop.f32.mrf.mxu0
    %520 = vdwg.mxu0
    %v521 = vadd.f32 %v448, %v518
    %v522 = vxor.u32 %v521, 2147483648
    %v523 = vmul.f32 %v522, 1.442695
    %v524 = vpow.pop %v523
    %v525 = vadd.f32 %v524, 1.0
    %v526 = vrcp.pop %v525
    %v527 = vmul.f32 1.0, %v526
    %v528 = vtanh.pop %v521
    %v529 = vmul.f32 %v527, %v436
    %531 = vrot.lane.b32.xlu0 %v528, 32
    %v532 = vpop.permute.xlu0 %531
    %v534 = vmul.f32 %v527, %v532
    %536 = vrot.lane.b32.xlu0 %v534, 32
    %v537 = vpop.permute.xlu0 %536
    %v539 = vadd.f32 %v529, %v537
    %v540 = vtanh.pop %v539
    %542 = vrot.lane.b32.xlu0 %v540, 32
    %v543 = vpop.permute.xlu0 %542
    %v545 = vmul.f32 %v527, %v543
    %547 = vrot.lane.b32.xlu0 %v545, 64
    %v548 = vpop.permute.xlu0 %547
    %550 = vst.msk [vmem:[#allocation3 + $0x3] sm:$0x1] %vm240, %v548
    %v551 = vld [vmem:[#allocation2 + $0x4] sm:$0x1]
    %v552 = vsel %vm19, %v548, 0
    %554 = vmatprep.subr.mxu0 0.0
    %555 = vmatpush1.msra.mxu0 0.0
    %556 = vmatprep.subr.mxu0 0.0
    %557 = vmatpush1.msra.mxu0 0.0
    %558 = vmatprep.subr.mxu0 0.0
    %559 = vmatpush1.msra.mxu0 0.0
    %560 = vmatprep.subr.mxu0 0.0
    %561 = vmatpush1.msra.mxu0 0.0
    %562 = vmatprep.subr.mxu0 0.0
    %563 = vmatpush1.msra.mxu0 0.0
    %564 = vmatprep.subr.mxu0 0.0
    %565 = vmatpush1.msra.mxu0 0.0
    %566 = vmatprep.subr.mxu0 0.0
    %567 = vmatpush1.msra.mxu0 0.0
    %568 = vmatprep.subr.mxu0 0.0
    %569 = vmatpush1.msra.mxu0 0.0
    %570 = vmatprep.subr.mxu0 0.0
    %571 = vmatpush1.msra.mxu0 0.0
    %572 = vmatprep.subr.mxu0 0.0
    %573 = vmatpush1.msra.mxu0 0.0
    %574 = vmatprep.subr.mxu0 0.0
    %575 = vmatpush1.msra.mxu0 0.0
    %576 = vmatprep.subr.mxu0 0.0
    %577 = vmatpush1.msra.mxu0 0.0
    %578 = vmatprep.subr.mxu0 0.0
    %579 = vmatpush1.msra.mxu0 %v136
    %580 = vmatprep.subr.mxu0 0.0
    %581 = vmatpush1.msra.mxu0 %v135
    %582 = vmatprep.subr.mxu0 0.0
    %583 = vmatpush1.msra.mxu0 %v134
    %584 = vmatprep.subr.mxu0 0.0
    %585 = vmatpush1.msra.mxu0 %v133
    %586 = vmatprep.subr.mxu0 0.0
    %587 = vmatpush2.msra.mxu0 0.0
    %588 = vmatprep.subr.mxu0 0.0
    %589 = vmatpush2.msra.mxu0 0.0
    %590 = vmatprep.subr.mxu0 0.0
    %591 = vmatpush2.msra.mxu0 0.0
    %592 = vmatprep.subr.mxu0 0.0
    %593 = vmatpush2.msra.mxu0 0.0
    %594 = vmatprep.subr.mxu0 0.0
    %595 = vmatpush2.msra.mxu0 0.0
    %596 = vmatprep.subr.mxu0 0.0
    %597 = vmatpush2.msra.mxu0 0.0
    %598 = vmatprep.subr.mxu0 0.0
    %599 = vmatpush2.msra.mxu0 0.0
    %600 = vmatprep.subr.mxu0 0.0
    %601 = vmatpush2.msra.mxu0 0.0
    %602 = vmatprep.subr.mxu0 0.0
    %603 = vmatpush2.msra.mxu0 0.0
    %604 = vmatprep.subr.mxu0 0.0
    %605 = vmatpush2.msra.mxu0 0.0
    %606 = vmatprep.subr.mxu0 0.0
    %607 = vmatpush2.msra.mxu0 0.0
    %608 = vmatprep.subr.mxu0 0.0
    %609 = vmatpush2.msra.mxu0 0.0
    %610 = vmatprep.subr.mxu0 0.0
    %611 = vmatpush2.msra.mxu0 0.0
    %612 = vmatprep.subr.mxu0 0.0
    %613 = vmatpush2.msra.mxu0 0.0
    %614 = vmatprep.subr.mxu0 0.0
    %615 = vmatpush2.msra.mxu0 0.0
    %616 = vmatprep.subr.mxu0 0.0
    %617 = vmatpush2.msra.mxu0 0.0
    %618 = vmatprep.mubr.f32.mxu0 0.0
    %619 = vmatmul.mubr.f32.gmra.mxu0 %v552
    %v620 = vpop.f32.mrf.mxu0
    %v621 = vadd.f32 0.0, %v620
    %v622 = vpop.f32.mrf.mxu0
    %623 = vdwg.mxu0
    %v624 = vadd.f32 %v551, %v621
    %v625 = vxor.u32 %v624, 2147483648
    %v626 = vmul.f32 %v625, 1.442695
    %v627 = vpow.pop %v626
    %v628 = vadd.f32 %v627, 1.0
    %v629 = vrcp.pop %v628
    %v630 = vmul.f32 1.0, %v629
    %v631 = vtanh.pop %v624
    %v632 = vmul.f32 %v630, %v539
    %634 = vrot.lane.b32.xlu0 %v631, 32
    %v635 = vpop.permute.xlu0 %634
    %v637 = vmul.f32 %v630, %v635
    %639 = vrot.lane.b32.xlu0 %v637, 32
    %v640 = vpop.permute.xlu0 %639
    %v642 = vadd.f32 %v632, %v640
    %v643 = vtanh.pop %v642
    %645 = vrot.lane.b32.xlu0 %v643, 32
    %v646 = vpop.permute.xlu0 %645
    %v648 = vmul.f32 %v630, %v646
    %650 = vrot.lane.b32.xlu0 %v648, 64
    %v651 = vpop.permute.xlu0 %650
    %653 = vst.msk [vmem:[#allocation3 + $0x4] sm:$0x1] %vm240, %v651
    %v654 = vld [vmem:[#allocation2 + $0x5] sm:$0x1]
    %v655 = vsel %vm19, %v651, 0
    %657 = vmatprep.subr.mxu0 0.0
    %658 = vmatpush1.msra.mxu0 0.0
    %659 = vmatprep.subr.mxu0 0.0
    %660 = vmatpush1.msra.mxu0 0.0
    %661 = vmatprep.subr.mxu0 0.0
    %662 = vmatpush1.msra.mxu0 0.0
    %663 = vmatprep.subr.mxu0 0.0
    %664 = vmatpush1.msra.mxu0 0.0
    %665 = vmatprep.subr.mxu0 0.0
    %666 = vmatpush1.msra.mxu0 0.0
    %667 = vmatprep.subr.mxu0 0.0
    %668 = vmatpush1.msra.mxu0 0.0
    %669 = vmatprep.subr.mxu0 0.0
    %670 = vmatpush1.msra.mxu0 0.0
    %671 = vmatprep.subr.mxu0 0.0
    %672 = vmatpush1.msra.mxu0 0.0
    %673 = vmatprep.subr.mxu0 0.0
    %674 = vmatpush1.msra.mxu0 0.0
    %675 = vmatprep.subr.mxu0 0.0
    %676 = vmatpush1.msra.mxu0 0.0
    %677 = vmatprep.subr.mxu0 0.0
    %678 = vmatpush1.msra.mxu0 0.0
    %679 = vmatprep.subr.mxu0 0.0
    %680 = vmatpush1.msra.mxu0 0.0
    %681 = vmatprep.subr.mxu0 0.0
    %682 = vmatpush1.msra.mxu0 %v136
    %683 = vmatprep.subr.mxu0 0.0
    %684 = vmatpush1.msra.mxu0 %v135
    %685 = vmatprep.subr.mxu0 0.0
    %686 = vmatpush1.msra.mxu0 %v134
    %687 = vmatprep.subr.mxu0 0.0
    %688 = vmatpush1.msra.mxu0 %v133
    %689 = vmatprep.subr.mxu0 0.0
    %690 = vmatpush2.msra.mxu0 0.0
    %691 = vmatprep.subr.mxu0 0.0
    %692 = vmatpush2.msra.mxu0 0.0
    %693 = vmatprep.subr.mxu0 0.0
    %694 = vmatpush2.msra.mxu0 0.0
    %695 = vmatprep.subr.mxu0 0.0
    %696 = vmatpush2.msra.mxu0 0.0
    %697 = vmatprep.subr.mxu0 0.0
    %698 = vmatpush2.msra.mxu0 0.0
    %699 = vmatprep.subr.mxu0 0.0
    %700 = vmatpush2.msra.mxu0 0.0
    %701 = vmatprep.subr.mxu0 0.0
    %702 = vmatpush2.msra.mxu0 0.0
    %703 = vmatprep.subr.mxu0 0.0
    %704 = vmatpush2.msra.mxu0 0.0
    %705 = vmatprep.subr.mxu0 0.0
    %706 = vmatpush2.msra.mxu0 0.0
    %707 = vmatprep.subr.mxu0 0.0
    %708 = vmatpush2.msra.mxu0 0.0
    %709 = vmatprep.subr.mxu0 0.0
    %710 = vmatpush2.msra.mxu0 0.0
    %711 = vmatprep.subr.mxu0 0.0
    %712 = vmatpush2.msra.mxu0 0.0
    %713 = vmatprep.subr.mxu0 0.0
    %714 = vmatpush2.msra.mxu0 0.0
    %715 = vmatprep.subr.mxu0 0.0
    %716 = vmatpush2.msra.mxu0 0.0
    %717 = vmatprep.subr.mxu0 0.0
    %718 = vmatpush2.msra.mxu0 0.0
    %719 = vmatprep.subr.mxu0 0.0
    %720 = vmatpush2.msra.mxu0 0.0
    %721 = vmatprep.mubr.f32.mxu0 0.0
    %722 = vmatmul.mubr.f32.gmra.mxu0 %v655
    %v723 = vpop.f32.mrf.mxu0
    %v724 = vadd.f32 0.0, %v723
    %v725 = vpop.f32.mrf.mxu0
    %726 = vdwg.mxu0
    %v727 = vadd.f32 %v654, %v724
    %v728 = vxor.u32 %v727, 2147483648
    %v729 = vmul.f32 %v728, 1.442695
    %v730 = vpow.pop %v729
    %v731 = vadd.f32 %v730, 1.0
    %v732 = vrcp.pop %v731
    %v733 = vmul.f32 1.0, %v732
    %v734 = vtanh.pop %v727
    %v735 = vmul.f32 %v733, %v642
    %737 = vrot.lane.b32.xlu0 %v734, 32
    %v738 = vpop.permute.xlu0 %737
    %v740 = vmul.f32 %v733, %v738
    %742 = vrot.lane.b32.xlu0 %v740, 32
    %v743 = vpop.permute.xlu0 %742
    %v745 = vadd.f32 %v735, %v743
    %v746 = vtanh.pop %v745
    %748 = vrot.lane.b32.xlu0 %v746, 32
    %v749 = vpop.permute.xlu0 %748
    %v751 = vmul.f32 %v733, %v749
    %753 = vrot.lane.b32.xlu0 %v751, 64
    %v754 = vpop.permute.xlu0 %753
    %756 = vst.msk [vmem:[#allocation3 + $0x5] sm:$0x1] %vm240, %v754
    %v757 = vld [vmem:[#allocation2 + $0x6] sm:$0x1]
    %v758 = vsel %vm19, %v754, 0
    %760 = vmatprep.subr.mxu0 0.0
    %761 = vmatpush1.msra.mxu0 0.0
    %762 = vmatprep.subr.mxu0 0.0
    %763 = vmatpush1.msra.mxu0 0.0
    %764 = vmatprep.subr.mxu0 0.0
    %765 = vmatpush1.msra.mxu0 0.0
    %766 = vmatprep.subr.mxu0 0.0
    %767 = vmatpush1.msra.mxu0 0.0
    %768 = vmatprep.subr.mxu0 0.0
    %769 = vmatpush1.msra.mxu0 0.0
    %770 = vmatprep.subr.mxu0 0.0
    %771 = vmatpush1.msra.mxu0 0.0
    %772 = vmatprep.subr.mxu0 0.0
    %773 = vmatpush1.msra.mxu0 0.0
    %774 = vmatprep.subr.mxu0 0.0
    %775 = vmatpush1.msra.mxu0 0.0
    %776 = vmatprep.subr.mxu0 0.0
    %777 = vmatpush1.msra.mxu0 0.0
    %778 = vmatprep.subr.mxu0 0.0
    %779 = vmatpush1.msra.mxu0 0.0
    %780 = vmatprep.subr.mxu0 0.0
    %781 = vmatpush1.msra.mxu0 0.0
    %782 = vmatprep.subr.mxu0 0.0
    %783 = vmatpush1.msra.mxu0 0.0
    %784 = vmatprep.subr.mxu0 0.0
    %785 = vmatpush1.msra.mxu0 %v136
    %786 = vmatprep.subr.mxu0 0.0
    %787 = vmatpush1.msra.mxu0 %v135
    %788 = vmatprep.subr.mxu0 0.0
    %789 = vmatpush1.msra.mxu0 %v134
    %790 = vmatprep.subr.mxu0 0.0
    %791 = vmatpush1.msra.mxu0 %v133
    %792 = vmatprep.subr.mxu0 0.0
    %793 = vmatpush2.msra.mxu0 0.0
    %794 = vmatprep.subr.mxu0 0.0
    %795 = vmatpush2.msra.mxu0 0.0
    %796 = vmatprep.subr.mxu0 0.0
    %797 = vmatpush2.msra.mxu0 0.0
    %798 = vmatprep.subr.mxu0 0.0
    %799 = vmatpush2.msra.mxu0 0.0
    %800 = vmatprep.subr.mxu0 0.0
    %801 = vmatpush2.msra.mxu0 0.0
    %802 = vmatprep.subr.mxu0 0.0
    %803 = vmatpush2.msra.mxu0 0.0
    %804 = vmatprep.subr.mxu0 0.0
    %805 = vmatpush2.msra.mxu0 0.0
    %806 = vmatprep.subr.mxu0 0.0
    %807 = vmatpush2.msra.mxu0 0.0
    %808 = vmatprep.subr.mxu0 0.0
    %809 = vmatpush2.msra.mxu0 0.0
    %810 = vmatprep.subr.mxu0 0.0
    %811 = vmatpush2.msra.mxu0 0.0
    %812 = vmatprep.subr.mxu0 0.0
    %813 = vmatpush2.msra.mxu0 0.0
    %814 = vmatprep.subr.mxu0 0.0
    %815 = vmatpush2.msra.mxu0 0.0
    %816 = vmatprep.subr.mxu0 0.0
    %817 = vmatpush2.msra.mxu0 0.0
    %818 = vmatprep.subr.mxu0 0.0
    %819 = vmatpush2.msra.mxu0 0.0
    %820 = vmatprep.subr.mxu0 0.0
    %821 = vmatpush2.msra.mxu0 0.0
    %822 = vmatprep.subr.mxu0 0.0
    %823 = vmatpush2.msra.mxu0 0.0
    %824 = vmatprep.mubr.f32.mxu0 0.0
    %825 = vmatmul.mubr.f32.gmra.mxu0 %v758
    %v826 = vpop.f32.mrf.mxu0
    %v827 = vadd.f32 0.0, %v826
    %v828 = vpop.f32.mrf.mxu0
    %829 = vdwg.mxu0
    %v830 = vadd.f32 %v757, %v827
    %v831 = vxor.u32 %v830, 2147483648
    %v832 = vmul.f32 %v831, 1.442695
    %v833 = vpow.pop %v832
    %v834 = vadd.f32 %v833, 1.0
    %v835 = vrcp.pop %v834
    %v836 = vmul.f32 1.0, %v835
    %v837 = vtanh.pop %v830
    %v838 = vmul.f32 %v836, %v745
    %840 = vrot.lane.b32.xlu0 %v837, 32
    %v841 = vpop.permute.xlu0 %840
    %v843 = vmul.f32 %v836, %v841
    %845 = vrot.lane.b32.xlu0 %v843, 32
    %v846 = vpop.permute.xlu0 %845
    %v848 = vadd.f32 %v838, %v846
    %v849 = vtanh.pop %v848
    %851 = vrot.lane.b32.xlu0 %v849, 32
    %v852 = vpop.permute.xlu0 %851
    %v854 = vmul.f32 %v836, %v852
    %856 = vrot.lane.b32.xlu0 %v854, 64
    %v857 = vpop.permute.xlu0 %856
    %859 = vst.msk [vmem:[#allocation3 + $0x6] sm:$0x1] %vm240, %v857
    %v860 = vld [vmem:[#allocation2 + $0x7] sm:$0x1]
    %v861 = vsel %vm19, %v857, 0
    %863 = vmatprep.subr.mxu0 0.0
    %864 = vmatpush1.msra.mxu0 0.0
    %865 = vmatprep.subr.mxu0 0.0
    %866 = vmatpush1.msra.mxu0 0.0
    %867 = vmatprep.subr.mxu0 0.0
    %868 = vmatpush1.msra.mxu0 0.0
    %869 = vmatprep.subr.mxu0 0.0
    %870 = vmatpush1.msra.mxu0 0.0
    %871 = vmatprep.subr.mxu0 0.0
    %872 = vmatpush1.msra.mxu0 0.0
    %873 = vmatprep.subr.mxu0 0.0
    %874 = vmatpush1.msra.mxu0 0.0
    %875 = vmatprep.subr.mxu0 0.0
    %876 = vmatpush1.msra.mxu0 0.0
    %877 = vmatprep.subr.mxu0 0.0
    %878 = vmatpush1.msra.mxu0 0.0
    %879 = vmatprep.subr.mxu0 0.0
    %880 = vmatpush1.msra.mxu0 0.0
    %881 = vmatprep.subr.mxu0 0.0
    %882 = vmatpush1.msra.mxu0 0.0
    %883 = vmatprep.subr.mxu0 0.0
    %884 = vmatpush1.msra.mxu0 0.0
    %885 = vmatprep.subr.mxu0 0.0
    %886 = vmatpush1.msra.mxu0 0.0
    %887 = vmatprep.subr.mxu0 0.0
    %888 = vmatpush1.msra.mxu0 %v136
    %889 = vmatprep.subr.mxu0 0.0
    %890 = vmatpush1.msra.mxu0 %v135
    %891 = vmatprep.subr.mxu0 0.0
    %892 = vmatpush1.msra.mxu0 %v134
    %893 = vmatprep.subr.mxu0 0.0
    %894 = vmatpush1.msra.mxu0 %v133
    %895 = vmatprep.subr.mxu0 0.0
    %896 = vmatpush2.msra.mxu0 0.0
    %897 = vmatprep.subr.mxu0 0.0
    %898 = vmatpush2.msra.mxu0 0.0
    %899 = vmatprep.subr.mxu0 0.0
    %900 = vmatpush2.msra.mxu0 0.0
    %901 = vmatprep.subr.mxu0 0.0
    %902 = vmatpush2.msra.mxu0 0.0
    %903 = vmatprep.subr.mxu0 0.0
    %904 = vmatpush2.msra.mxu0 0.0
    %905 = vmatprep.subr.mxu0 0.0
    %906 = vmatpush2.msra.mxu0 0.0
    %907 = vmatprep.subr.mxu0 0.0
    %908 = vmatpush2.msra.mxu0 0.0
    %909 = vmatprep.subr.mxu0 0.0
    %910 = vmatpush2.msra.mxu0 0.0
    %911 = vmatprep.subr.mxu0 0.0
    %912 = vmatpush2.msra.mxu0 0.0
    %913 = vmatprep.subr.mxu0 0.0
    %914 = vmatpush2.msra.mxu0 0.0
    %915 = vmatprep.subr.mxu0 0.0
    %916 = vmatpush2.msra.mxu0 0.0
    %917 = vmatprep.subr.mxu0 0.0
    %918 = vmatpush2.msra.mxu0 0.0
    %919 = vmatprep.subr.mxu0 0.0
    %920 = vmatpush2.msra.mxu0 0.0
    %921 = vmatprep.subr.mxu0 0.0
    %922 = vmatpush2.msra.mxu0 0.0
    %923 = vmatprep.subr.mxu0 0.0
    %924 = vmatpush2.msra.mxu0 0.0
    %925 = vmatprep.subr.mxu0 0.0
    %926 = vmatpush2.msra.mxu0 0.0
    %927 = vmatprep.mubr.f32.mxu0 0.0
    %928 = vmatmul.mubr.f32.gmra.mxu0 %v861
    %v929 = vpop.f32.mrf.mxu0
    %v930 = vadd.f32 0.0, %v929
    %v931 = vpop.f32.mrf.mxu0
    %932 = vdwg.mxu0
    %v933 = vadd.f32 %v860, %v930
    %v934 = vxor.u32 %v933, 2147483648
    %v935 = vmul.f32 %v934, 1.442695
    %v936 = vpow.pop %v935
    %v937 = vadd.f32 %v936, 1.0
    %v938 = vrcp.pop %v937
    %v939 = vmul.f32 1.0, %v938
    %v940 = vtanh.pop %v933
    %v941 = vmul.f32 %v939, %v848
    %943 = vrot.lane.b32.xlu0 %v940, 32
    %v944 = vpop.permute.xlu0 %943
    %v946 = vmul.f32 %v939, %v944
    %948 = vrot.lane.b32.xlu0 %v946, 32
    %v949 = vpop.permute.xlu0 %948
    %v951 = vadd.f32 %v941, %v949
    %v952 = vtanh.pop %v951
    %954 = vrot.lane.b32.xlu0 %v952, 32
    %v955 = vpop.permute.xlu0 %954
    %v957 = vmul.f32 %v939, %v955
    %959 = vrot.lane.b32.xlu0 %v957, 64
    %v960 = vpop.permute.xlu0 %959
    %962 = vst.msk [vmem:[#allocation3 + $0x7] sm:$0x1] %vm240, %v960
    %v963 = vld [vmem:[#allocation3] sm:$0xff]
    %v964 = vmul.f32 %v963, %v43
    %v965 = vadd.f32 %v964, %v41
    %966 = vst.msk [vmem:[#allocation3] sm:$0xff] %vm19, %v965
    // Predicated region
    $region18: #{ecgi_temporal_forward.1} parent=1 // pred_check
      _
    $region19: #{ecgi_temporal_forward.1} parent=1 // pred_check_branch
      %968 = sbr.rel (0) target = $region21
    $region20: #{ecgi_temporal_forward.1} parent=1 // pred_region
      %s970 = ssub.s32 128, 128
      %971 = vsyncadd [#allocation4], %s970
      %s973 = sshll.u32 [#allocation3], 4
      %s974 = int_to_ptr.vmem [resolvable:$true] %s973
      %976 = dma.vmem_to_hbm [thread:$0]  %s974, 128, %s4, [#allocation4]
    $region21: #{ecgi_temporal_forward.1} parent=1 // pred_fallthru
      _
    // Predicated region
    $region22: #{ecgi_temporal_forward.1} parent=1 // pred_check
      _
    $region23: #{ecgi_temporal_forward.1} parent=1 // pred_check_branch
      %978 = sbr.rel (0) target = $region25
    $region24: #{ecgi_temporal_forward.1} parent=1 // pred_region
      %979 = dma.done [#allocation4], 128
    $region25: #{ecgi_temporal_forward.1} parent=1 // pred_fallthru
      _
    %980 = vsyncpa [#allocation4], 1

</llo_original>
